<compile_context>
chip_gen: v7x
topology: tpu7x:2x2x1
jax: 0.10.0
libtpu: 0.0.40
codegen_flags: <defaults>
</compile_context>

<pallas_src>
import jax
import jax.numpy as jnp
from jax.experimental import pallas as pl
from jax.experimental.pallas import tpu as pltpu


def _round_up(v: int, m: int) -> int:
    return (v + m - 1) // m * m


def _fused_matmul_bias_relu_kernel(lhs_ref, rhs_ref, bias_ref, out_ref):
    """Single-K-step case: one (TM, TN) output tile, full K in one block."""
    acc = jnp.dot(lhs_ref[...], rhs_ref[...], preferred_element_type=jnp.float32)
    y = acc + bias_ref[...].astype(jnp.float32)
    out_ref[...] = jnp.maximum(y, 0.0).astype(out_ref.dtype)


def _fused_matmul_bias_relu_acc_kernel(lhs_ref, rhs_ref, bias_ref, out_ref, acc_ref):
    """Multi-K-step case: grid axis 2 walks the contraction, resident f32 acc."""
    k = pl.program_id(2)

    @pl.when(k == 0)
    def _init():
        acc_ref[...] = jnp.zeros_like(acc_ref)

    acc_ref[...] += jnp.dot(
        lhs_ref[...], rhs_ref[...], preferred_element_type=jnp.float32
    )

    @pl.when(k == pl.num_programs(2) - 1)
    def _epilogue():
        y = acc_ref[...] + bias_ref[...].astype(jnp.float32)
        out_ref[...] = jnp.maximum(y, 0.0).astype(out_ref.dtype)


def conv_bn_relu_forward(
    x: jax.Array,            # (B, C_in, H, W)  NCHW, like PyTorch
    weight: jax.Array,       # (C_out, C_in, kh, kw)  OIHW
    conv_bias,               # (C_out,) or None
    bn_gamma: jax.Array,     # (C_out,)
    bn_beta: jax.Array,      # (C_out,)
    bn_mean: jax.Array,      # (C_out,)  running mean
    bn_var: jax.Array,       # (C_out,)  running var
    *,
    stride: int = 1,
    padding: int = 0,
    eps: float = 1e-5,
    scaler_scale: float = 1.0,   # MulShift.scale
    scaler_bias: float = 0.0,    # MulShift.bias
    scaler_fl: float = 0.0,      # MulShift.fl
) -> jax.Array:
    B, C_in, H, W = x.shape
    C_out, C_in_w, kh, kw = weight.shape
    assert C_in_w == C_in, "groups != 1 not supported"

    # ---- Fold BN (eval stats) + MulShift into one per-channel affine ----
    inv_std = 1.0 / jnp.sqrt(bn_var.astype(jnp.float32) + eps)
    a = bn_gamma.astype(jnp.float32) * inv_std
    pow2 = jnp.float32(2.0 ** (-scaler_fl))
    eff_scale = a * scaler_scale * pow2                                   # (C_out,)
    cb = (conv_bias.astype(jnp.float32) if conv_bias is not None
          else jnp.zeros((C_out,), jnp.float32))
    eff_shift = (((cb - bn_mean.astype(jnp.float32)) * a
                  + bn_beta.astype(jnp.float32)) * scaler_scale
                 + scaler_bias) * pow2                                    # (C_out,)

    # Scale folded into weights (f32), then cast once to bf16 for the MXU.
    w_folded = weight.astype(jnp.float32) * eff_scale[:, None, None, None]

    # ---- im2col (layout plumbing stays in the XLA wrapper) ----
    # TODO(synk): keep the surrounding network in NHWC so these two transposes
    #             (full activation read+write each) can be dropped.
    H_out = (H + 2 * padding - kh) // stride + 1
    W_out = (W + 2 * padding - kw) // stride + 1
    x_nhwc = jnp.transpose(x, (0, 2, 3, 1))
    x_padded = jnp.pad(
        x_nhwc, ((0, 0), (padding, padding), (padding, padding), (0, 0)))
    cols = []
    for i in range(kh):
        for j in range(kw):
            cols.append(
                x_padded[:, i:i + (H_out - 1) * stride + 1:stride,
                            j:j + (W_out - 1) * stride + 1:stride, :])
    patches = jnp.concatenate(cols, axis=-1)          # (B, Ho, Wo, kh*kw*C_in)

    M = B * H_out * W_out
    K = kh * kw * C_in
    N = C_out
    # bf16 streamed operands, f32 accumulation inside the kernel.
    lhs = patches.reshape(M, K).astype(jnp.bfloat16)
    # (kh, kw, C_in, C_out) flattening matches the patch ordering above.
    rhs = jnp.transpose(w_folded, (2, 3, 1, 0)).reshape(K, N).astype(jnp.bfloat16)
    bias2d = eff_shift.reshape(1, N).astype(jnp.float32)

    # ---- Tiling: lane-dense N spanning all channels, big M tiles, minimal K pad ----
    N_pad = _round_up(N, 128)
    if N_pad <= 512:
        TN = N_pad                                    # stream the im2col lhs once
    else:
        TN = next(t for t in (512, 256, 128) if N_pad % t == 0)

    K128 = _round_up(K, 128)
    single_k = K128 <= 1024                           # full-K block fits comfortably

    TM = 512
    if N_pad // TN == 1 and M > 256:
        TM = 256                                      # keep >=2 parallel blocks (v7x 2 TCs)
    TM = min(TM, _round_up(M, 16))                    # bf16 sublanes pack in 16s
    M_pad = _round_up(M, TM)

    out_dtype = x.dtype
    if single_k:
        # No K padding at all: block last dim == full array dim is legal.
        lhs_p = jnp.pad(lhs, ((0, M_pad - M), (0, 0))) if M_pad > M else lhs
        rhs_p = jnp.pad(rhs, ((0, 0), (0, N_pad - N))) if N_pad > N else rhs
        bias_p = jnp.pad(bias2d, ((0, 0), (0, N_pad - N))) if N_pad > N else bias2d

        grid = (M_pad // TM, N_pad // TN)
        cost = pl.CostEstimate(
            flops=2 * M_pad * N_pad * K,
            transcendentals=0,
            bytes_accessed=(lhs_p.size * 2 + rhs_p.size * 2
                            + bias_p.size * 4 + M_pad * N_pad * out_dtype.itemsize),
        )
        out_p = pl.pallas_call(
            _fused_matmul_bias_relu_kernel,
            out_shape=jax.ShapeDtypeStruct((M_pad, N_pad), out_dtype),
            grid=grid,
            in_specs=[
                pl.BlockSpec((TM, K), lambda i, j: (i, 0)),   # im2col patches (full K)
                pl.BlockSpec((K, TN), lambda i, j: (0, j)),   # folded weights (full K)
                pl.BlockSpec((1, TN), lambda i, j: (0, j)),   # folded bias
            ],
            out_specs=pl.BlockSpec((TM, TN), lambda i, j: (i, j)),
            compiler_params=pltpu.CompilerParams(
                dimension_semantics=("parallel", "parallel"),
                vmem_limit_bytes=32 * 1024 * 1024,  # safe on v5e/v6e/v7x at these tiles
            ),
            cost_estimate=cost,
        )(lhs_p, rhs_p, bias_p)
    else:
        # K is large: pad K only to a multiple of 128 and pick TK that divides it.
        K_pad = K128
        TK = next(t for t in (512, 256, 128) if K_pad % t == 0)
        lhs_p = jnp.pad(lhs, ((0, M_pad - M), (0, K_pad - K)))
        rhs_p = jnp.pad(rhs, ((0, K_pad - K), (0, N_pad - N)))
        bias_p = jnp.pad(bias2d, ((0, 0), (0, N_pad - N))) if N_pad > N else bias2d

        grid = (M_pad // TM, N_pad // TN, K_pad // TK)
        cost = pl.CostEstimate(
            flops=2 * M_pad * N_pad * K_pad,
            transcendentals=0,
            bytes_accessed=(lhs_p.size * 2 + rhs_p.size * 2
                            + bias_p.size * 4 + M_pad * N_pad * out_dtype.itemsize),
        )
        out_p = pl.pallas_call(
            _fused_matmul_bias_relu_acc_kernel,
            out_shape=jax.ShapeDtypeStruct((M_pad, N_pad), out_dtype),
            grid=grid,
            in_specs=[
                pl.BlockSpec((TM, TK), lambda i, j, k: (i, k)),
                pl.BlockSpec((TK, TN), lambda i, j, k: (k, j)),
                pl.BlockSpec((1, TN), lambda i, j, k: (0, j)),
            ],
            out_specs=pl.BlockSpec((TM, TN), lambda i, j, k: (i, j)),
            scratch_shapes=[pltpu.VMEM((TM, TN), jnp.float32)],
            compiler_params=pltpu.CompilerParams(
                dimension_semantics=("parallel", "parallel", "arbitrary"),
                vmem_limit_bytes=32 * 1024 * 1024,
            ),
            cost_estimate=cost,
        )(lhs_p, rhs_p, bias_p)

    out2d = out_p[:M, :N]
    out = out2d.reshape(B, H_out, W_out, C_out)
    return jnp.transpose(out, (0, 3, 1, 2))               # back to NCHW


if __name__ == "__main__":
    key = jax.random.PRNGKey(0)
    k1, k2, k3, k4, k5, k6, k7 = jax.random.split(key, 7)

    # Small shapes consistent with the module: ConvBNReLU(4, 8, 3, padding=1)
    B, C_in, H, W = 2, 4, 16, 16
    C_out, ksz, stride, padding = 8, 3, 1, 1

    x = jax.random.normal(k1, (B, C_in, H, W), dtype=jnp.float32)
    weight = jax.random.normal(k2, (C_out, C_in, ksz, ksz), dtype=jnp.float32) * 0.1
    conv_bias = jax.random.normal(k3, (C_out,), dtype=jnp.float32) * 0.1
    bn_gamma = 1.0 + 0.5 * jax.random.normal(k4, (C_out,), dtype=jnp.float32)
    bn_beta = 0.1 * jax.random.normal(k5, (C_out,), dtype=jnp.float32)
    bn_mean = 0.1 * jax.random.normal(k6, (C_out,), dtype=jnp.float32)
    bn_var = jax.random.uniform(k7, (C_out,), dtype=jnp.float32,
                                minval=0.5, maxval=1.5)

    # MulShift buffers default to scale=1.0, bias=0.0, fl=0.0 in the module.
    y = conv_bn_relu_forward(
        x, weight, conv_bias, bn_gamma, bn_beta, bn_mean, bn_var,
        stride=stride, padding=padding,
        scaler_scale=1.0, scaler_bias=0.0, scaler_fl=0.0)
    y = jax.block_until_ready(y)

    # Pure-JAX reference (f32): conv -> BN (eval stats) -> MulShift -> ReLU.
    y_ref = jax.lax.conv_general_dilated(
        x, weight, (stride, stride),
        ((padding, padding), (padding, padding)),
        dimension_numbers=("NCHW", "OIHW", "NCHW"))
    y_ref = y_ref + conv_bias[None, :, None, None]
    inv_std = 1.0 / jnp.sqrt(bn_var + 1e-5)
    y_ref = ((y_ref - bn_mean[None, :, None, None])
             * (bn_gamma * inv_std)[None, :, None, None]
             + bn_beta[None, :, None, None])
    y_ref = (y_ref * 1.0 + 0.0) * (2.0 ** -0.0)
    y_ref = jnp.maximum(y_ref, 0.0)

    assert y.shape == (B, C_out, H, W) and y.dtype == x.dtype
    max_err = float(jnp.max(jnp.abs(y - y_ref)))
    # Tolerance widened for bf16 MXU inputs (accumulation and epilogue are f32).
    assert jnp.allclose(y, y_ref, atol=7.5e-2, rtol=5e-2), f"max abs err {max_err}"

    print("KERNEL_OK")
</pallas_src>

<mosaic_0001>
module attributes {stable_mosaic.version = 11 : i64} {
  func.func @_fused_matmul_bias_relu_kernel(%arg0: i32, %arg1: i32, %arg2: memref<256x36xbf16, #tpu.memory_space<vmem>>, %arg3: memref<36x128xbf16, #tpu.memory_space<vmem>>, %arg4: memref<1x128xf32, #tpu.memory_space<vmem>>, %arg5: memref<256x128xf32, #tpu.memory_space<vmem>>) attributes {dimension_semantics = [#tpu.dimension_semantics<parallel>, #tpu.dimension_semantics<parallel>], iteration_bounds = array<i64: 2, 1>, scalar_prefetch = 0 : i64, scratch_operands = 0 : i64, tpu.core_type = #tpu.core_type<tc>, window_params = [{transform_indices = @transform_0, window_bounds = array<i64: 256, 36>}, {transform_indices = @transform_1, window_bounds = array<i64: 36, 128>}, {transform_indices = @transform_2, window_bounds = array<i64: 1, 128>}, {transform_indices = @transform_3, window_bounds = array<i64: 256, 128>}]} {
    %c0 = arith.constant 0 : index
    %c0_0 = arith.constant 0 : index
    %0 = vector.load %arg2[%c0, %c0_0] : memref<256x36xbf16, #tpu.memory_space<vmem>>, vector<256x36xbf16>
    %c0_1 = arith.constant 0 : index
    %c0_2 = arith.constant 0 : index
    %1 = vector.load %arg3[%c0_1, %c0_2] : memref<36x128xbf16, #tpu.memory_space<vmem>>, vector<36x128xbf16>
    %cst = arith.constant dense<0.000000e+00> : vector<256x128xf32>
    %2 = tpu.matmul %0, %1, %cst {dimension_numbers = #tpu.dot_dimension_numbers<[1], [0], [0], [1], [0, 0, 1, 1], [], []>} : vector<256x36xbf16>, vector<36x128xbf16>, vector<256x128xf32> -> vector<256x128xf32>
    %c0_3 = arith.constant 0 : index
    %c0_4 = arith.constant 0 : index
    %3 = vector.load %arg4[%c0_3, %c0_4] : memref<1x128xf32, #tpu.memory_space<vmem>>, vector<1x128xf32>
    %4 = vector.broadcast %3 : vector<1x128xf32> to vector<256x128xf32>
    %5 = arith.addf %2, %4 : vector<256x128xf32>
    %cst_5 = arith.constant 0.000000e+00 : f32
    %6 = vector.broadcast %cst_5 : f32 to vector<256x128xf32>
    %7 = arith.maximumf %5, %6 : vector<256x128xf32>
    %c0_6 = arith.constant 0 : index
    %c0_7 = arith.constant 0 : index
    %8 = vector.load %arg5[%c0_6, %c0_7] : memref<256x128xf32, #tpu.memory_space<vmem>>, vector<256x128xf32>
    tpu.vector_store %arg5[%c0_6, %c0_7], %7 {strides = array<i32>} : memref<256x128xf32, #tpu.memory_space<vmem>>, vector<256x128xf32>,
    return
  }
  func.func @transform_0(%arg0: i32, %arg1: i32) -> (i32, i32) {
    %c0_i32 = arith.constant 0 : i32
    %c0_i32_0 = arith.constant 0 : i32
    return %arg0, %c0_i32 : i32, i32
  }
  func.func @transform_1(%arg0: i32, %arg1: i32) -> (i32, i32) {
    %c0_i32 = arith.constant 0 : i32
    %c0_i32_0 = arith.constant 0 : i32
    return %c0_i32, %arg1 : i32, i32
  }
  func.func @transform_2(%arg0: i32, %arg1: i32) -> (i32, i32) {
    %c0_i32 = arith.constant 0 : i32
    %c0_i32_0 = arith.constant 0 : i32
    return %c0_i32, %arg1 : i32, i32
  }
  func.func @transform_3(%arg0: i32, %arg1: i32) -> (i32, i32) {
    %c0_i32 = arith.constant 0 : i32
    return %arg0, %arg1 : i32, i32
  }
}

</mosaic_0001>

<llo_original>
// kernel: tpu_custom_call.1
$region0: #{tpu_custom_call.1}
  #allocation0 [shape = 'u32[]', space=smem, size = 0x4, offset = 0x4, fixed_abs, tag = 'smem constant byte address 0x4 - core index']
  #allocation1 [shape = 'u32[144,128]{1,0:T(1,128)}', space=vmem, size = 0x12000, scoped, tag = 'internal scratch']
  %s0 = inlined_call_operand.vmem [shape: bf16[512,36], index: 0, kind: input, shape index: {}]
  %s1 = inlined_call_operand.vmem [shape: bf16[36,128], index: 1, kind: input, shape index: {}]
  %s2 = inlined_call_operand.vmem [shape: f32[1,128], index: 2, kind: input, shape index: {}]
  %s3 = inlined_call_operand.hbm [shape: f32[512,128], index: 3, kind: output, shape index: {}]
  %s4 = sld [smem:[#allocation0]]
  $region45: #{tpu_custom_call.1} parent=0
    _
  %s6 = ssub.s32 1, %s4
  %s7 = scalar_select 0, %s6, %s4
  $region1: #{tpu_custom_call.1} parent=0
    #allocation2 [shape = 'u8[262144]{0}', space=vmem, size = 0x40000, scoped, tag = 'output window, operand 0']
    #allocation3 [shape = 's32[2]{0}', space=sflag, size = 0x8, scoped, tag = 'scoped memory for tpu_custom_call.1']
    %8 = vsyncpa [#allocation3], 0
    %s9 = scalar_lea.sflag [#allocation3], 1
    %10 = vsyncpa %s9, 0
    loop: start=0, step=1, limit=4
    $region2: #{tpu_custom_call.1} parent=1 // loop_pre_header
      _
    $region3: #{tpu_custom_call.1} parent=1 // loop_header
      %s12 = sphi 0, %s16
      %p13 = scmp.ge.s32.totalorder %s12, 4
      %s19 = sphi 0, %s31
      %s20 = sphi 0, %s27
      %s21 = sphi 0, %s19
      %s22 = sphi 0, %s20
      %s23 = sphi 0, %s21
      %s24 = sphi 0, %s22
      %s34 = sphi 0, %s36
      %s37 = sphi 0, %s34
      %s38 = sphi 0, %s37
      %s54 = sphi 0, %s38
      %s60 = sphi 0, %s62
      %s63 = sphi 0, %s60
      %s64 = sphi 0, %s63
      %s80 = sphi 0, %s64
      %s86 = sphi 0, %s88
      %s89 = sphi 0, %s86
      %s90 = sphi 0, %s89
      %s106 = sphi 0, %s90
      %s114 = sphi 0, %s116
      %s117 = sphi 0, %s114
      %s118 = sphi 0, %s117
      %s134 = sphi 0, %s118
    $region4: #{tpu_custom_call.1} parent=1 // loop_header_branch
      %15 = sbr.rel (%p13) target = $region8
    $region5: #{tpu_custom_call.1} parent=1 // loop_body
      %s17 = ssub.s32 %s12, 1
      %s18 = ssub.s32 %s12, 2
      %s25 = sadd.s32 1, %s20
      %p26 = scmp.ge.s32.totalorder %s25, 1
      %s27 = scalar_select %p26, 0, %s25
      %s28 = sadd.s32 1, %s19
      %s29 = scalar_select %p26, %s28, %s19
      %p30 = scmp.ge.s32.totalorder %s29, 2
      %s31 = scalar_select %p30, 0, %s29
      %s32 = ssub.s32 %s19, %s31
      %p33 = scmp.eq.s32.totalorder %s32, 0
      %s35 = sadd.s32 %s34, 1
      %s36 = scalar_select %p33, %s34, %s35
      %p39 = pneg %p33
      %p40 = scmp.eq.s32.totalorder %s12, 1
      %p41 = por %p39, %p40
      %p42 = scmp.ne.s32.totalorder %s34, %s37
      %p43 = scmp.eq.s32.totalorder %s12, 0
      %p44 = por %p42, %p43
      %p45 = scmp.ne.s32.totalorder %s34, %s37
      %p46 = scmp.eq.s32.totalorder %s17, 1
      %p47 = por %p45, %p46
      %p48 = scmp.ne.s32.totalorder %s37, %s38
      %p49 = scmp.eq.s32.totalorder %s17, 0
      %p50 = por %p48, %p49
      %p51 = scmp.ne.s32.totalorder %s37, %s38
      %p52 = scmp.eq.s32.totalorder %s18, 1
      %p53 = por %p51, %p52
      %p55 = scmp.ne.s32.totalorder %s38, %s54
      %p56 = scmp.eq.s32.totalorder %s18, 0
      %p57 = por %p55, %p56
      %s58 = ssub.s32 %s20, %s27
      %p59 = scmp.eq.s32.totalorder %s58, 0
      %s61 = sadd.s32 %s60, 1
      %s62 = scalar_select %p59, %s60, %s61
      %p65 = pneg %p59
      %p66 = scmp.eq.s32.totalorder %s12, 1
      %p67 = por %p65, %p66
      %p68 = scmp.ne.s32.totalorder %s60, %s63
      %p69 = scmp.eq.s32.totalorder %s12, 0
      %p70 = por %p68, %p69
      %p71 = scmp.ne.s32.totalorder %s60, %s63
      %p72 = scmp.eq.s32.totalorder %s17, 1
      %p73 = por %p71, %p72
      %p74 = scmp.ne.s32.totalorder %s63, %s64
      %p75 = scmp.eq.s32.totalorder %s17, 0
      %p76 = por %p74, %p75
      %p77 = scmp.ne.s32.totalorder %s63, %s64
      %p78 = scmp.eq.s32.totalorder %s18, 1
      %p79 = por %p77, %p78
      %p81 = scmp.ne.s32.totalorder %s64, %s80
      %p82 = scmp.eq.s32.totalorder %s18, 0
      %p83 = por %p81, %p82
      %s84 = ssub.s32 %s20, %s27
      %p85 = scmp.eq.s32.totalorder %s84, 0
      %s87 = sadd.s32 %s86, 1
      %s88 = scalar_select %p85, %s86, %s87
      %p91 = pneg %p85
      %p92 = scmp.eq.s32.totalorder %s12, 1
      %p93 = por %p91, %p92
      %p94 = scmp.ne.s32.totalorder %s86, %s89
      %p95 = scmp.eq.s32.totalorder %s12, 0
      %p96 = por %p94, %p95
      %p97 = scmp.ne.s32.totalorder %s86, %s89
      %p98 = scmp.eq.s32.totalorder %s17, 1
      %p99 = por %p97, %p98
      %p100 = scmp.ne.s32.totalorder %s89, %s90
      %p101 = scmp.eq.s32.totalorder %s17, 0
      %p102 = por %p100, %p101
      %p103 = scmp.ne.s32.totalorder %s89, %s90
      %p104 = scmp.eq.s32.totalorder %s18, 1
      %p105 = por %p103, %p104
      %p107 = scmp.ne.s32.totalorder %s90, %s106
      %p108 = scmp.eq.s32.totalorder %s18, 0
      %p109 = por %p107, %p108
      %s110 = ssub.s32 %s19, %s31
      %s111 = ssub.s32 %s20, %s27
      %s112 = sor.u32 %s110, %s111
      %p113 = scmp.eq.s32.totalorder %s112, 0
      %s115 = sadd.s32 %s114, 1
      %s116 = scalar_select %p113, %s114, %s115
      %p119 = pneg %p113
      %p120 = scmp.eq.s32.totalorder %s12, 1
      %p121 = por %p119, %p120
      %p122 = scmp.ne.s32.totalorder %s114, %s117
      %p123 = scmp.eq.s32.totalorder %s12, 0
      %p124 = por %p122, %p123
      %p125 = scmp.ne.s32.totalorder %s114, %s117
      %p126 = scmp.eq.s32.totalorder %s17, 1
      %p127 = por %p125, %p126
      %p128 = scmp.ne.s32.totalorder %s117, %s118
      %p129 = scmp.eq.s32.totalorder %s17, 0
      %p130 = por %p128, %p129
      %p131 = scmp.ne.s32.totalorder %s117, %s118
      %p132 = scmp.eq.s32.totalorder %s18, 1
      %p133 = por %p131, %p132
      %p135 = scmp.ne.s32.totalorder %s118, %s134
      %p136 = scmp.eq.s32.totalorder %s18, 0
      %p137 = por %p135, %p136
      %p138 = scmp.le.s32.totalorder 1, %s12
      %p139 = scmp.lt.s32.totalorder %s12, 3
      %p140 = pnand %p138, %p139
      %p141 = pneg %p140
      // Predicated region
      $region9: #{tpu_custom_call.1} parent=5 // pred_check
        _
      $region10: #{tpu_custom_call.1} parent=5 // pred_check_branch
        %143 = sbr.rel (%p140) target = $region12
      $region11: #{tpu_custom_call.1} parent=5 // pred_region
        %s144 = ssub.s32 %s12, 1
        // Predicated region
        $region13: #{tpu_custom_call.1} parent=11 // pred_check
          %p145 = pneg %p76
        $region14: #{tpu_custom_call.1} parent=11 // pred_check_branch
          %147 = sbr.rel (%p145) target = $region16
        $region15: #{tpu_custom_call.1} parent=11 // pred_region
          %p148 = scmp.lt.s32.totalorder %s22, 0
          %s149 = scalar_select %p148, %s22, 0
          %s150 = smul.addr %s149, 4
          %s151 = scalar_lea.vmem %s1, %s150
        $region16: #{tpu_custom_call.1} parent=11 // pred_fallthru
          _
        // Predicated region
        $region17: #{tpu_custom_call.1} parent=11 // pred_check
          %p152 = pneg %p102
        $region18: #{tpu_custom_call.1} parent=11 // pred_check_branch
          %154 = sbr.rel (%p152) target = $region20
        $region19: #{tpu_custom_call.1} parent=11 // pred_region
          %p155 = scmp.lt.s32.totalorder %s22, 0
          %s156 = scalar_select %p155, %s22, 0
          %s157 = scalar_lea.vmem %s2, %s156
        $region20: #{tpu_custom_call.1} parent=11 // pred_fallthru
          _
      $region12: #{tpu_custom_call.1} parent=5 // pred_fallthru
        _
      %p158 = scmp.lt.s32.totalorder %s12, 2
      // Predicated region
      $region21: #{tpu_custom_call.1} parent=5 // pred_check
        %p159 = pneg %p158
      $region22: #{tpu_custom_call.1} parent=5 // pred_check_branch
        %161 = sbr.rel (%p159) target = $region24
      $region23: #{tpu_custom_call.1} parent=5 // pred_region
        // Predicated region
        $region25: #{tpu_custom_call.1} parent=23 // pred_check
          %p162 = pneg %p44
        $region26: #{tpu_custom_call.1} parent=23 // pred_check_branch
          %164 = sbr.rel (%p162) target = $region28
        $region27: #{tpu_custom_call.1} parent=23 // pred_region
          %s165 = smul.u32 32, %s19
          %p166 = scmp.lt.s32.totalorder %s165, 63
          %s167 = scalar_select %p166, %s165, 63
          %s168 = smul.addr %s167, 4
          %s169 = scalar_lea.vmem %s0, %s168
          %s170 = smul.u32 32, %s19
        $region28: #{tpu_custom_call.1} parent=23 // pred_fallthru
          _
      $region24: #{tpu_custom_call.1} parent=5 // pred_fallthru
        _
      %p171 = scmp.le.s32.totalorder 1, %s12
      %p172 = scmp.lt.s32.totalorder %s12, 3
      %p173 = pnand %p171, %p172
      %p174 = pneg %p173
      // Predicated region
      $region29: #{tpu_custom_call.1} parent=5 // pred_check
        _
      $region30: #{tpu_custom_call.1} parent=5 // pred_check_branch
        %176 = sbr.rel (%p173) target = $region32
      $region31: #{tpu_custom_call.1} parent=5 // pred_region
        %s177 = ssub.s32 %s12, 1
        %s178 = smul.u32 32, %s21
        %p179 = scmp.lt.s32.totalorder %s178, 63
        %s180 = scalar_select %p179, %s178, 63
        %s181 = smul.addr %s180, 4
        %s182 = scalar_lea.vmem %s0, %s181
        %p183 = pneg %p50
        %p184 = pneg %p47
        %p185 = scmp.lt.s32.totalorder %s22, 0
        %s186 = scalar_select %p185, %s22, 0
        %s187 = smul.addr %s186, 4
        %s188 = scalar_lea.vmem %s1, %s187
        %p189 = pneg %p76
        %p190 = pneg %p73
        %p191 = scmp.lt.s32.totalorder %s22, 0
        %s192 = scalar_select %p191, %s22, 0
        %s193 = scalar_lea.vmem %s2, %s192
        %p194 = pneg %p102
        %p195 = pneg %p99
        %p196 = pneg %p130
        %p197 = pneg %p127
        %s198 = sand.u32 %s117, 1
        %s199 = scalar_lea.sflag [#allocation3], %s198
        %s200 = sand.u32 %s117, 1
        %s201 = smul.addr %s200, 256
        %s202 = scalar_lea.vmem [#allocation2], %s201
        %s203 = smul.u32 32, %s21
        %p204 = scmp.lt.s32.totalorder %s203, 63
        %s205 = scalar_select %p204, %s203, 63
        %s206 = smul.addr %s205, 4
        %s207 = scalar_lea.vmem %s0, %s206
        %s208 = smul.u32 32, %s21
        %p209 = scmp.lt.s32.totalorder %s22, 0
        %s210 = scalar_select %p209, %s22, 0
        %s211 = smul.addr %s210, 4
        %s212 = scalar_lea.vmem %s1, %s211
        %p213 = scmp.lt.s32.totalorder %s22, 0
        %s214 = scalar_select %p213, %s22, 0
        %s215 = scalar_lea.vmem %s2, %s214
        %s216 = smul.u32 32, %s21
        %v218 = vld [vmem:[%s207] sm:$0xf]
        %v219 = vld [vmem:[%s207 + $0x4] sm:$0xf]
        %v220 = vld [vmem:[%s207 + $0x8] sm:$0xf]
        %v221 = vld [vmem:[%s207 + $0xc] sm:$0xf]
        %v222 = vld [vmem:[%s207 + $0x10] sm:$0xf]
        %v223 = vld [vmem:[%s207 + $0x14] sm:$0xf]
        %v224 = vld [vmem:[%s207 + $0x18] sm:$0xf]
        %v225 = vld [vmem:[%s207 + $0x1c] sm:$0xf]
        %v226 = vld [vmem:[%s207 + $0x20] sm:$0xf]
        %v227 = vld [vmem:[%s207 + $0x24] sm:$0xf]
        %v228 = vld [vmem:[%s207 + $0x28] sm:$0xf]
        %v229 = vld [vmem:[%s207 + $0x2c] sm:$0xf]
        %v230 = vld [vmem:[%s207 + $0x30] sm:$0xf]
        %v231 = vld [vmem:[%s207 + $0x34] sm:$0xf]
        %v232 = vld [vmem:[%s207 + $0x38] sm:$0xf]
        %v233 = vld [vmem:[%s207 + $0x3c] sm:$0xf]
        %v234 = vld [vmem:[%s207 + $0x40] sm:$0xf]
        %v235 = vld [vmem:[%s207 + $0x44] sm:$0xf]
        %v236 = vld [vmem:[%s207 + $0x48] sm:$0xf]
        %v237 = vld [vmem:[%s207 + $0x4c] sm:$0xf]
        %v238 = vld [vmem:[%s207 + $0x50] sm:$0xf]
        %v239 = vld [vmem:[%s207 + $0x54] sm:$0xf]
        %v240 = vld [vmem:[%s207 + $0x58] sm:$0xf]
        %v241 = vld [vmem:[%s207 + $0x5c] sm:$0xf]
        %v242 = vld [vmem:[%s207 + $0x60] sm:$0xf]
        %v243 = vld [vmem:[%s207 + $0x64] sm:$0xf]
        %v244 = vld [vmem:[%s207 + $0x68] sm:$0xf]
        %v245 = vld [vmem:[%s207 + $0x6c] sm:$0xf]
        %v246 = vld [vmem:[%s207 + $0x70] sm:$0xf]
        %v247 = vld [vmem:[%s207 + $0x74] sm:$0xf]
        %v248 = vld [vmem:[%s207 + $0x78] sm:$0xf]
        %v249 = vld [vmem:[%s207 + $0x7c] sm:$0xf]
        %v250 = vld [vmem:[%s212] sm:$0xf]
        %v251 = vld [vmem:[%s212 + $0x4] sm:$0xf]
        %v252 = vld [vmem:[%s212 + $0x8] sm:$0xf]
        %v253 = vld [vmem:[%s212 + $0xc] sm:$0xf]
        %v254 = vld [vmem:[%s212 + $0x10] sm:$0x3]
        %v255 = vld [vmem:[%s215] sm:$0x1]
        %v257 = vlaneseq
        %v258 = vshrl.u32 %v257, 7
        %v259 = vsub.s32 0, %v258
        %v260 = vrot.slane %v255, %v259
        %v294 = vunpack.c.l.b16 %v218
        %v295 = vunpack.c.l.b16 %v219
        %v296 = vunpack.c.l.b16 %v220
        %v297 = vunpack.c.l.b16 %v221
        %v298 = vunpack.c.l.b16 %v222
        %v299 = vunpack.c.l.b16 %v223
        %v300 = vunpack.c.l.b16 %v224
        %v301 = vunpack.c.l.b16 %v225
        %v302 = vunpack.c.l.b16 %v226
        %v303 = vunpack.c.l.b16 %v227
        %v304 = vunpack.c.l.b16 %v228
        %v305 = vunpack.c.l.b16 %v229
        %v306 = vunpack.c.l.b16 %v230
        %v307 = vunpack.c.l.b16 %v231
        %v308 = vunpack.c.l.b16 %v232
        %v309 = vunpack.c.l.b16 %v233
        %v310 = vunpack.c.l.b16 %v234
        %v311 = vunpack.c.l.b16 %v235
        %v312 = vunpack.c.l.b16 %v236
        %v313 = vunpack.c.l.b16 %v237
        %v314 = vunpack.c.l.b16 %v238
        %v315 = vunpack.c.l.b16 %v239
        %v316 = vunpack.c.l.b16 %v240
        %v317 = vunpack.c.l.b16 %v241
        %v318 = vunpack.c.l.b16 %v242
        %v319 = vunpack.c.l.b16 %v243
        %v320 = vunpack.c.l.b16 %v244
        %v321 = vunpack.c.l.b16 %v245
        %v322 = vunpack.c.l.b16 %v246
        %v323 = vunpack.c.l.b16 %v247
        %v324 = vunpack.c.l.b16 %v248
        %v325 = vunpack.c.l.b16 %v249
        %v326 = vpack.c.b16 %v295, %v294
        %v327 = vpack.c.b16 %v297, %v296
        %v328 = vpack.c.b16 %v299, %v298
        %v329 = vpack.c.b16 %v301, %v300
        %v330 = vpack.c.b16 %v303, %v302
        %v331 = vpack.c.b16 %v305, %v304
        %v332 = vpack.c.b16 %v307, %v306
        %v333 = vpack.c.b16 %v309, %v308
        %v334 = vpack.c.b16 %v311, %v310
        %v335 = vpack.c.b16 %v313, %v312
        %v336 = vpack.c.b16 %v315, %v314
        %v337 = vpack.c.b16 %v317, %v316
        %v338 = vpack.c.b16 %v319, %v318
        %v339 = vpack.c.b16 %v321, %v320
        %v340 = vpack.c.b16 %v323, %v322
        %v341 = vpack.c.b16 %v325, %v324
        %v347 = vunpack.c.l.b16 %v250
        %v348 = vunpack.c.l.b16 %v251
        %v349 = vunpack.c.l.b16 %v252
        %v350 = vunpack.c.l.b16 %v253
        %v351 = vunpack.c.l.b16 %v254
        %v352 = vpack.c.b16 %v348, %v347
        %v353 = vpack.c.b16 %v350, %v349
        %v354 = vpack.c.b16 %v351, %v351
        %vm357 = vcmask 293888
        %v359 = vsel %vm357, %v326, 0
        %v362 = vsel %vm357, %v327, 0
        %v365 = vsel %vm357, %v328, 0
        %v368 = vsel %vm357, %v329, 0
        %v371 = vsel %vm357, %v330, 0
        %v374 = vsel %vm357, %v331, 0
        %v377 = vsel %vm357, %v332, 0
        %v380 = vsel %vm357, %v333, 0
        %v383 = vsel %vm357, %v334, 0
        %v386 = vsel %vm357, %v335, 0
        %v389 = vsel %vm357, %v336, 0
        %v392 = vsel %vm357, %v337, 0
        %v395 = vsel %vm357, %v338, 0
        %v398 = vsel %vm357, %v339, 0
        %v401 = vsel %vm357, %v340, 0
        %v404 = vsel %vm357, %v341, 0
        %vm406 = vcmask 1041408
        %v408 = vsel %vm406, %v354, 0
        %410 = vmatprep.subr.bf16.mxu0 0
        %411 = vmatpush1.bf16.msra.mxu0 %v352
        %412 = vmatprep.subr.bf16.mxu0 0
        %413 = vmatpush1.bf16.msra.mxu0 %v353
        %414 = vmatprep.subr.bf16.mxu0 0
        %415 = vmatpush1.bf16.msra.mxu0 %v408
        %416 = vmatprep.subr.bf16.mxu0 0
        %417 = vmatpush1.bf16.msra.mxu0 0
        %418 = vmatprep.subr.bf16.mxu0 0
        %419 = vmatpush1.bf16.msra.mxu0 0
        %420 = vmatprep.subr.bf16.mxu0 0
        %421 = vmatpush1.bf16.msra.mxu0 0
        %422 = vmatprep.subr.bf16.mxu0 0
        %423 = vmatpush1.bf16.msra.mxu0 0
        %424 = vmatprep.subr.bf16.mxu0 0
        %425 = vmatpush1.bf16.msra.mxu0 0
        %426 = vmatprep.subr.bf16.mxu0 0
        %427 = vmatpush1.bf16.msra.mxu0 0
        %428 = vmatprep.subr.bf16.mxu0 0
        %429 = vmatpush1.bf16.msra.mxu0 0
        %430 = vmatprep.subr.bf16.mxu0 0
        %431 = vmatpush1.bf16.msra.mxu0 0
        %432 = vmatprep.subr.bf16.mxu0 0
        %433 = vmatpush1.bf16.msra.mxu0 0
        %434 = vmatprep.subr.bf16.mxu0 0
        %435 = vmatpush1.bf16.msra.mxu0 0
        %436 = vmatprep.subr.bf16.mxu0 0
        %437 = vmatpush1.bf16.msra.mxu0 0
        %438 = vmatprep.subr.bf16.mxu0 0
        %439 = vmatpush1.bf16.msra.mxu0 0
        %440 = vmatprep.subr.bf16.mxu0 0
        %441 = vmatpush1.bf16.msra.mxu0 0
        %442 = vmatprep.mubr.bf16.mxu0 0
        %443 = vmatmul.mubr.bf16.gmra.mrb[0].mxu0 %v359
        %v444 = vpop.f32.mrb[0].mxu0
        %v445 = vadd.f32 %v260, %v444
        %v446 = vpop.f32.mrb[0].mxu0
        %v447 = vpop.f32.mrb[0].mxu0
        %v448 = vadd.f32 %v260, %v447
        %v449 = vpop.f32.mrb[0].mxu0
        %450 = vmatprep.mubr.bf16.mxu0 0
        %451 = vmatmul.mubr.bf16.gmra.mrb[0].mxu0 %v362
        %v452 = vpop.f32.mrb[0].mxu0
        %v453 = vadd.f32 %v260, %v452
        %v454 = vpop.f32.mrb[0].mxu0
        %v455 = vpop.f32.mrb[0].mxu0
        %v456 = vadd.f32 %v260, %v455
        %v457 = vpop.f32.mrb[0].mxu0
        %458 = vmatprep.mubr.bf16.mxu0 0
        %459 = vmatmul.mubr.bf16.gmra.mrb[0].mxu0 %v365
        %v460 = vpop.f32.mrb[0].mxu0
        %v461 = vadd.f32 %v260, %v460
        %v462 = vpop.f32.mrb[0].mxu0
        %v463 = vpop.f32.mrb[0].mxu0
        %v464 = vadd.f32 %v260, %v463
        %v465 = vpop.f32.mrb[0].mxu0
        %466 = vmatprep.mubr.bf16.mxu0 0
        %467 = vmatmul.mubr.bf16.gmra.mrb[0].mxu0 %v368
        %v468 = vpop.f32.mrb[0].mxu0
        %v469 = vadd.f32 %v260, %v468
        %v470 = vpop.f32.mrb[0].mxu0
        %v471 = vpop.f32.mrb[0].mxu0
        %v472 = vadd.f32 %v260, %v471
        %v473 = vpop.f32.mrb[0].mxu0
        %474 = vmatprep.mubr.bf16.mxu0 0
        %475 = vmatmul.mubr.bf16.gmra.mrb[0].mxu0 %v371
        %v476 = vpop.f32.mrb[0].mxu0
        %v477 = vadd.f32 %v260, %v476
        %v478 = vpop.f32.mrb[0].mxu0
        %v479 = vpop.f32.mrb[0].mxu0
        %v480 = vadd.f32 %v260, %v479
        %v481 = vpop.f32.mrb[0].mxu0
        %482 = vmatprep.mubr.bf16.mxu0 0
        %483 = vmatmul.mubr.bf16.gmra.mrb[0].mxu0 %v374
        %v484 = vpop.f32.mrb[0].mxu0
        %v485 = vadd.f32 %v260, %v484
        %v486 = vpop.f32.mrb[0].mxu0
        %v487 = vpop.f32.mrb[0].mxu0
        %v488 = vadd.f32 %v260, %v487
        %v489 = vpop.f32.mrb[0].mxu0
        %490 = vmatprep.mubr.bf16.mxu0 0
        %491 = vmatmul.mubr.bf16.gmra.mrb[0].mxu0 %v377
        %v492 = vpop.f32.mrb[0].mxu0
        %v493 = vadd.f32 %v260, %v492
        %v494 = vpop.f32.mrb[0].mxu0
        %v495 = vpop.f32.mrb[0].mxu0
        %v496 = vadd.f32 %v260, %v495
        %v497 = vpop.f32.mrb[0].mxu0
        %498 = vmatprep.mubr.bf16.mxu0 0
        %499 = vmatmul.mubr.bf16.gmra.mrb[0].mxu0 %v380
        %v500 = vpop.f32.mrb[0].mxu0
        %v501 = vadd.f32 %v260, %v500
        %v502 = vpop.f32.mrb[0].mxu0
        %v503 = vpop.f32.mrb[0].mxu0
        %v504 = vadd.f32 %v260, %v503
        %v505 = vpop.f32.mrb[0].mxu0
        %506 = vmatprep.mubr.bf16.mxu0 0
        %507 = vmatmul.mubr.bf16.gmra.mrb[0].mxu0 %v383
        %v508 = vpop.f32.mrb[0].mxu0
        %v509 = vadd.f32 %v260, %v508
        %v510 = vpop.f32.mrb[0].mxu0
        %v511 = vpop.f32.mrb[0].mxu0
        %v512 = vadd.f32 %v260, %v511
        %v513 = vpop.f32.mrb[0].mxu0
        %514 = vmatprep.mubr.bf16.mxu0 0
        %515 = vmatmul.mubr.bf16.gmra.mrb[0].mxu0 %v386
        %v516 = vpop.f32.mrb[0].mxu0
        %v517 = vadd.f32 %v260, %v516
        %v518 = vpop.f32.mrb[0].mxu0
        %v519 = vpop.f32.mrb[0].mxu0
        %v520 = vadd.f32 %v260, %v519
        %v521 = vpop.f32.mrb[0].mxu0
        %522 = vmatprep.mubr.bf16.mxu0 0
        %523 = vmatmul.mubr.bf16.gmra.mrb[0].mxu0 %v389
        %v524 = vpop.f32.mrb[0].mxu0
        %v525 = vadd.f32 %v260, %v524
        %v526 = vpop.f32.mrb[0].mxu0
        %v527 = vpop.f32.mrb[0].mxu0
        %v528 = vadd.f32 %v260, %v527
        %v529 = vpop.f32.mrb[0].mxu0
        %530 = vmatprep.mubr.bf16.mxu0 0
        %531 = vmatmul.mubr.bf16.gmra.mrb[0].mxu0 %v392
        %v532 = vpop.f32.mrb[0].mxu0
        %v533 = vadd.f32 %v260, %v532
        %v534 = vpop.f32.mrb[0].mxu0
        %v535 = vpop.f32.mrb[0].mxu0
        %v536 = vadd.f32 %v260, %v535
        %v537 = vpop.f32.mrb[0].mxu0
        %538 = vmatprep.mubr.bf16.mxu0 0
        %539 = vmatmul.mubr.bf16.gmra.mrb[0].mxu0 %v395
        %v540 = vpop.f32.mrb[0].mxu0
        %v541 = vadd.f32 %v260, %v540
        %v542 = vpop.f32.mrb[0].mxu0
        %v543 = vpop.f32.mrb[0].mxu0
        %v544 = vadd.f32 %v260, %v543
        %v545 = vpop.f32.mrb[0].mxu0
        %546 = vmatprep.mubr.bf16.mxu0 0
        %547 = vmatmul.mubr.bf16.gmra.mrb[0].mxu0 %v398
        %v548 = vpop.f32.mrb[0].mxu0
        %v549 = vadd.f32 %v260, %v548
        %v550 = vpop.f32.mrb[0].mxu0
        %v551 = vpop.f32.mrb[0].mxu0
        %v552 = vadd.f32 %v260, %v551
        %v553 = vpop.f32.mrb[0].mxu0
        %554 = vmatprep.mubr.bf16.mxu0 0
        %555 = vmatmul.mubr.bf16.gmra.mrb[0].mxu0 %v401
        %v556 = vpop.f32.mrb[0].mxu0
        %v557 = vadd.f32 %v260, %v556
        %v558 = vpop.f32.mrb[0].mxu0
        %v559 = vpop.f32.mrb[0].mxu0
        %v560 = vadd.f32 %v260, %v559
        %v561 = vpop.f32.mrb[0].mxu0
        %562 = vmatprep.mubr.bf16.mxu0 0
        %563 = vmatmul.mubr.bf16.gmra.mrb[0].mxu0 %v404
        %v564 = vpop.f32.mrb[0].mxu0
        %v565 = vadd.f32 %v260, %v564
        %v566 = vpop.f32.mrb[0].mxu0
        %v567 = vpop.f32.mrb[0].mxu0
        %v568 = vadd.f32 %v260, %v567
        %v569 = vpop.f32.mrb[0].mxu0
        %570 = vdwg.mxu0
        %v571 = vmax.f32 %v445, 0.0
        %v572 = vmax.f32 %v448, 0.0
        %v573 = vmax.f32 %v453, 0.0
        %v574 = vmax.f32 %v456, 0.0
        %v575 = vmax.f32 %v461, 0.0
        %v576 = vmax.f32 %v464, 0.0
        %v577 = vmax.f32 %v469, 0.0
        %v578 = vmax.f32 %v472, 0.0
        %v579 = vmax.f32 %v477, 0.0
        %v580 = vmax.f32 %v480, 0.0
        %v581 = vmax.f32 %v485, 0.0
        %v582 = vmax.f32 %v488, 0.0
        %v583 = vmax.f32 %v493, 0.0
        %v584 = vmax.f32 %v496, 0.0
        %v585 = vmax.f32 %v501, 0.0
        %v586 = vmax.f32 %v504, 0.0
        %v587 = vmax.f32 %v509, 0.0
        %v588 = vmax.f32 %v512, 0.0
        %v589 = vmax.f32 %v517, 0.0
        %v590 = vmax.f32 %v520, 0.0
        %v591 = vmax.f32 %v525, 0.0
        %v592 = vmax.f32 %v528, 0.0
        %v593 = vmax.f32 %v533, 0.0
        %v594 = vmax.f32 %v536, 0.0
        %v595 = vmax.f32 %v541, 0.0
        %v596 = vmax.f32 %v544, 0.0
        %v597 = vmax.f32 %v549, 0.0
        %v598 = vmax.f32 %v552, 0.0
        %v599 = vmax.f32 %v557, 0.0
        %v600 = vmax.f32 %v560, 0.0
        %v601 = vmax.f32 %v565, 0.0
        %v602 = vmax.f32 %v568, 0.0
        %603 = vst [vmem:[%s202] sm:$0xff] %v571
        %604 = vst [vmem:[%s202 + $0x8] sm:$0xff] %v572
        %605 = vst [vmem:[%s202 + $0x10] sm:$0xff] %v573
        %606 = vst [vmem:[%s202 + $0x18] sm:$0xff] %v574
        %607 = vst [vmem:[%s202 + $0x20] sm:$0xff] %v575
        %608 = vst [vmem:[%s202 + $0x28] sm:$0xff] %v576
        %609 = vst [vmem:[%s202 + $0x30] sm:$0xff] %v577
        %610 = vst [vmem:[%s202 + $0x38] sm:$0xff] %v578
        %611 = vst [vmem:[%s202 + $0x40] sm:$0xff] %v579
        %612 = vst [vmem:[%s202 + $0x48] sm:$0xff] %v580
        %613 = vst [vmem:[%s202 + $0x50] sm:$0xff] %v581
        %614 = vst [vmem:[%s202 + $0x58] sm:$0xff] %v582
        %615 = vst [vmem:[%s202 + $0x60] sm:$0xff] %v583
        %616 = vst [vmem:[%s202 + $0x68] sm:$0xff] %v584
        %617 = vst [vmem:[%s202 + $0x70] sm:$0xff] %v585
        %618 = vst [vmem:[%s202 + $0x78] sm:$0xff] %v586
        %619 = vst [vmem:[%s202 + $0x80] sm:$0xff] %v587
        %620 = vst [vmem:[%s202 + $0x88] sm:$0xff] %v588
        %621 = vst [vmem:[%s202 + $0x90] sm:$0xff] %v589
        %622 = vst [vmem:[%s202 + $0x98] sm:$0xff] %v590
        %623 = vst [vmem:[%s202 + $0xa0] sm:$0xff] %v591
        %624 = vst [vmem:[%s202 + $0xa8] sm:$0xff] %v592
        %625 = vst [vmem:[%s202 + $0xb0] sm:$0xff] %v593
        %626 = vst [vmem:[%s202 + $0xb8] sm:$0xff] %v594
        %627 = vst [vmem:[%s202 + $0xc0] sm:$0xff] %v595
        %628 = vst [vmem:[%s202 + $0xc8] sm:$0xff] %v596
        %629 = vst [vmem:[%s202 + $0xd0] sm:$0xff] %v597
        %630 = vst [vmem:[%s202 + $0xd8] sm:$0xff] %v598
        %631 = vst [vmem:[%s202 + $0xe0] sm:$0xff] %v599
        %632 = vst [vmem:[%s202 + $0xe8] sm:$0xff] %v600
        %633 = vst [vmem:[%s202 + $0xf0] sm:$0xff] %v601
        %634 = vst [vmem:[%s202 + $0xf8] sm:$0xff] %v602
        %s635 = sand.u32 %s117, 1
        %s636 = scalar_lea.sflag [#allocation3], %s635
        %s637 = sand.u32 %s117, 1
        %s638 = smul.addr %s637, 256
        %s639 = scalar_lea.vmem [#allocation2], %s638
        // Predicated region
        $region33: #{tpu_custom_call.1} parent=31 // pred_check
          %p640 = pneg %p127
        $region34: #{tpu_custom_call.1} parent=31 // pred_check_branch
          %642 = sbr.rel (%p640) target = $region36
        $region35: #{tpu_custom_call.1} parent=31 // pred_region
          %s643 = smul.u32 32, %s21
          %s645 = ssub.s32 4096, 4096
          %646 = vsyncadd %s636, %s645
          %s647 = sadd.s32 %s22, %s643
          %s648 = smul.addr %s647, 128
          %s649 = scalar_lea.hbm %s3, %s648
          %s650 = sshll.u32 %s639, 4
          %s651 = int_to_ptr.vmem [resolvable:$true] %s650
          %656 = dma.vmem_to_hbm [thread:$0]  %s651, 4096, %s649, %s636, 128, 128, 8
        $region36: #{tpu_custom_call.1} parent=31 // pred_fallthru
          _
      $region32: #{tpu_custom_call.1} parent=5 // pred_fallthru
        _
      %p657 = scmp.le.s32.totalorder 2, %s12
      // Predicated region
      $region37: #{tpu_custom_call.1} parent=5 // pred_check
        %p658 = pneg %p657
      $region38: #{tpu_custom_call.1} parent=5 // pred_check_branch
        %660 = sbr.rel (%p658) target = $region40
      $region39: #{tpu_custom_call.1} parent=5 // pred_region
        %s661 = ssub.s32 %s12, 2
        // Predicated region
        $region41: #{tpu_custom_call.1} parent=39 // pred_check
          %p662 = pneg %p133
        $region42: #{tpu_custom_call.1} parent=39 // pred_check_branch
          %664 = sbr.rel (%p662) target = $region44
        $region43: #{tpu_custom_call.1} parent=39 // pred_region
          %s665 = sand.u32 %s118, 1
          %s666 = scalar_lea.sflag [#allocation3], %s665
          %s667 = sand.u32 %s118, 1
          %s668 = smul.addr %s667, 256
          %s669 = scalar_lea.vmem [#allocation2], %s668
          %670 = dma.done %s666, 4096
        $region44: #{tpu_custom_call.1} parent=39 // pred_fallthru
          _
      $region40: #{tpu_custom_call.1} parent=5 // pred_fallthru
        _
    $region6: #{tpu_custom_call.1} parent=1 // loop_footer
      %s16 = sadd.s32 1, %s12
    $region7: #{tpu_custom_call.1} parent=1 // loop_footer_branch
      %11 = sbr.rel target = $region3
    $region8: #{tpu_custom_call.1} parent=1 // loop_exit
      _
    %671 = vsyncpa [#allocation3], 1
    %s672 = scalar_lea.sflag [#allocation3], 1
    %673 = vsyncpa %s672, 1

</llo_original>
